<compile_context>
chip_gen: v5e
topology: v5e:2x2
jax: 0.10.0
libtpu: 0.0.40
codegen_flags: <defaults>
</compile_context>

<pallas_src>
import jax
import jax.numpy as jnp
from jax.experimental import pallas as pl
from jax.experimental.pallas import tpu as pltpu


def _round_up(n, m):
    return ((n + m - 1) // m) * m


def _net_kernel(x_ref, w1_ref, b1_ref, w2_ref, b2_ref, w3_ref, b3_ref, o_ref):
    # x arrives already in bf16 (cast once in the wrapper); all three dots are
    # bf16 MXU operands with f32 accumulation; bias/ReLU/softmax stay f32.
    x = x_ref[...]

    # Layer 1: Linear + ReLU
    h1 = jnp.dot(x, w1_ref[...], preferred_element_type=jnp.float32)
    h1 = jnp.maximum(h1 + b1_ref[...], 0.0)

    # Layer 2: Linear + ReLU
    h2 = jnp.dot(h1.astype(jnp.bfloat16), w2_ref[...],
                 preferred_element_type=jnp.float32)
    h2 = jnp.maximum(h2 + b2_ref[...], 0.0)

    # Layer 3: Linear
    logits = jnp.dot(h2.astype(jnp.bfloat16), w3_ref[...],
                     preferred_element_type=jnp.float32)
    logits = logits + b3_ref[...]                      # (tb, A)

    # Numerically stable softmax over dim=1 (action axis). Exact division so
    # each row sums to 1.0 to f32 precision.
    m = jnp.max(logits, axis=1, keepdims=True)
    e = jnp.exp(logits - m)
    denom = jnp.sum(e, axis=1, keepdims=True)
    o_ref[...] = (e / denom).astype(o_ref.dtype)


def prepare_params(params):
    """One-time parameter prep (hoisted out of the per-call path).

    Weights -> bf16 MXU operands (halves their HBM->VMEM bytes);
    biases -> f32 row vectors for VPU broadcast-add.
    """
    w1, b1, w2, b2, w3, b3 = params
    return (w1.astype(jnp.bfloat16), jnp.asarray(b1, jnp.float32).reshape(1, -1),
            w2.astype(jnp.bfloat16), jnp.asarray(b2, jnp.float32).reshape(1, -1),
            w3.astype(jnp.bfloat16), jnp.asarray(b3, jnp.float32).reshape(1, -1))


def net_forward(x, prepared, *, tb=1024):
    """Fused MLP forward. x: (B, obs_size) -> (B, n_actions) f32 probs."""
    w1b, b1f, w2b, b2f, w3b, b3f = prepared
    B, obs = x.shape
    A = w3b.shape[1]

    # Stream activations in bf16 (they are MXU operands anyway).
    xb = x.astype(jnp.bfloat16)

    # Batch tile: either one full-batch tile, or multiple-of-8 sublane tiles
    # with a ragged (masked) last tile -- no wrapper padding pass over x.
    if tb >= B:
        tb = B                       # block dim == full array dim is legal
    else:
        tb = max(8, (tb // 8) * 8)   # sublane-aligned tiles
    nb = pl.cdiv(B, tb)

    # Weights/biases: constant block index -> DMA'd once, VMEM-resident.
    def resident(a):
        return pl.BlockSpec(a.shape, lambda i: (0,) * a.ndim)

    out = pl.pallas_call(
        _net_kernel,
        out_shape=jax.ShapeDtypeStruct((B, A), jnp.float32),
        grid=(nb,),
        in_specs=[
            pl.BlockSpec((tb, obs), lambda i: (i, 0)),   # x: pipelined tiles
            resident(w1b), resident(b1f),
            resident(w2b), resident(b2f),
            resident(w3b), resident(b3f),
        ],
        out_specs=pl.BlockSpec((tb, A), lambda i: (i, 0)),
        compiler_params=pltpu.CompilerParams(
            dimension_semantics=("parallel",)),
    )(xb, w1b, b1f, w2b, b2f, w3b, b3f)
    return out


def init_params(key, obs_size, hidden_size, n_actions):
    """Mimics nn.Linear init: uniform(-1/sqrt(in), 1/sqrt(in)); W as (in, out)."""
    def linear(k, fan_in, fan_out):
        kw, kb = jax.random.split(k)
        bound = 1.0 / jnp.sqrt(fan_in)
        w = jax.random.uniform(kw, (fan_in, fan_out), jnp.float32, -bound, bound)
        b = jax.random.uniform(kb, (1, fan_out), jnp.float32, -bound, bound)
        return w, b

    k1, k2, k3 = jax.random.split(key, 3)
    w1, b1 = linear(k1, obs_size, hidden_size)
    w2, b2 = linear(k2, hidden_size, hidden_size)
    w3, b3 = linear(k3, hidden_size, n_actions)
    return (w1, b1, w2, b2, w3, b3)


def reference_forward(x, params):
    """Pure-JAX reference in the same mixed precision (bf16 MXU, f32 acc)."""
    w1, b1, w2, b2, w3, b3 = params
    bf = jnp.bfloat16
    h1 = jnp.maximum(
        jnp.dot(x.astype(bf), w1.astype(bf),
                preferred_element_type=jnp.float32) + b1, 0.0)
    h2 = jnp.maximum(
        jnp.dot(h1.astype(bf), w2.astype(bf),
                preferred_element_type=jnp.float32) + b2, 0.0)
    logits = jnp.dot(h2.astype(bf), w3.astype(bf),
                     preferred_element_type=jnp.float32) + b3
    return jax.nn.softmax(logits, axis=1)


# TODO(synk): Net.train() (CrossEntropyLoss backward + Adam step) is a training
# loop, not part of the forward pass; only the forward is implemented here.

if __name__ == "__main__":
    obs_size, hidden_size, n_actions = 16, 32, 8
    batch = 64                       # > tb below so the grid has 2 steps

    key = jax.random.PRNGKey(0)
    k_params, k_x = jax.random.split(key)
    params = init_params(k_params, obs_size, hidden_size, n_actions)
    prepared = prepare_params(params)
    x = jax.random.normal(k_x, (batch, obs_size), jnp.float32)

    out = jax.block_until_ready(net_forward(x, prepared, tb=32))
    ref = reference_forward(x, params)

    assert out.shape == (batch, n_actions)
    # bf16 matmuls -> small elementwise error vs the mixed-precision reference.
    assert jnp.allclose(out, ref, atol=2e-3, rtol=2e-3)
    # Exact softmax division -> rows sum to 1 to f32 precision.
    assert jnp.allclose(jnp.sum(out, axis=1), 1.0, atol=1e-3)

    print("KERNEL_OK")
</pallas_src>

<mosaic_0001>
module attributes {stable_mosaic.version = 11 : i64} {
  func.func @_net_kernel(%arg0: i32, %arg1: memref<32x16xbf16, #tpu.memory_space<vmem>>, %arg2: memref<16x32xbf16, #tpu.memory_space<vmem>>, %arg3: memref<1x32xf32, #tpu.memory_space<vmem>>, %arg4: memref<32x32xbf16, #tpu.memory_space<vmem>>, %arg5: memref<1x32xf32, #tpu.memory_space<vmem>>, %arg6: memref<32x8xbf16, #tpu.memory_space<vmem>>, %arg7: memref<1x8xf32, #tpu.memory_space<vmem>>, %arg8: memref<32x8xf32, #tpu.memory_space<vmem>>) attributes {dimension_semantics = [#tpu.dimension_semantics<parallel>], iteration_bounds = array<i64: 2>, scalar_prefetch = 0 : i64, scratch_operands = 0 : i64, tpu.core_type = #tpu.core_type<tc>, window_params = [{transform_indices = @transform_0, window_bounds = array<i64: 32, 16>}, {pipeline_mode = #tpu.pipeline_mode<synchronous>, transform_indices = @transform_1, window_bounds = array<i64: 16, 32>}, {pipeline_mode = #tpu.pipeline_mode<synchronous>, transform_indices = @transform_2, window_bounds = array<i64: 1, 32>}, {pipeline_mode = #tpu.pipeline_mode<synchronous>, transform_indices = @transform_3, window_bounds = array<i64: 32, 32>}, {pipeline_mode = #tpu.pipeline_mode<synchronous>, transform_indices = @transform_4, window_bounds = array<i64: 1, 32>}, {pipeline_mode = #tpu.pipeline_mode<synchronous>, transform_indices = @transform_5, window_bounds = array<i64: 32, 8>}, {pipeline_mode = #tpu.pipeline_mode<synchronous>, transform_indices = @transform_6, window_bounds = array<i64: 1, 8>}, {transform_indices = @transform_7, window_bounds = array<i64: 32, 8>}]} {
    %c0 = arith.constant 0 : index
    %c0_0 = arith.constant 0 : index
    %0 = vector.load %arg1[%c0, %c0_0] : memref<32x16xbf16, #tpu.memory_space<vmem>>, vector<32x16xbf16>
    %c0_1 = arith.constant 0 : index
    %c0_2 = arith.constant 0 : index
    %1 = vector.load %arg2[%c0_1, %c0_2] : memref<16x32xbf16, #tpu.memory_space<vmem>>, vector<16x32xbf16>
    %cst = arith.constant dense<0.000000e+00> : vector<32x32xf32>
    %2 = tpu.matmul %0, %1, %cst {dimension_numbers = #tpu.dot_dimension_numbers<[1], [0], [0], [1], [0, 0, 1, 1], [], []>} : vector<32x16xbf16>, vector<16x32xbf16>, vector<32x32xf32> -> vector<32x32xf32>
    %c0_3 = arith.constant 0 : index
    %c0_4 = arith.constant 0 : index
    %3 = vector.load %arg3[%c0_3, %c0_4] : memref<1x32xf32, #tpu.memory_space<vmem>>, vector<1x32xf32>
    %4 = vector.broadcast %3 : vector<1x32xf32> to vector<32x32xf32>
    %5 = arith.addf %2, %4 : vector<32x32xf32>
    %cst_5 = arith.constant 0.000000e+00 : f32
    %6 = vector.broadcast %cst_5 : f32 to vector<32x32xf32>
    %7 = arith.maximumf %5, %6 : vector<32x32xf32>
    %8 = arith.truncf %7 : vector<32x32xf32> to vector<32x32xbf16>
    %c0_6 = arith.constant 0 : index
    %c0_7 = arith.constant 0 : index
    %9 = vector.load %arg4[%c0_6, %c0_7] : memref<32x32xbf16, #tpu.memory_space<vmem>>, vector<32x32xbf16>
    %cst_8 = arith.constant dense<0.000000e+00> : vector<32x32xf32>
    %10 = tpu.matmul %8, %9, %cst_8 {dimension_numbers = #tpu.dot_dimension_numbers<[1], [0], [0], [1], [0, 0, 1, 1], [], []>} : vector<32x32xbf16>, vector<32x32xbf16>, vector<32x32xf32> -> vector<32x32xf32>
    %c0_9 = arith.constant 0 : index
    %c0_10 = arith.constant 0 : index
    %11 = vector.load %arg5[%c0_9, %c0_10] : memref<1x32xf32, #tpu.memory_space<vmem>>, vector<1x32xf32>
    %12 = vector.broadcast %11 : vector<1x32xf32> to vector<32x32xf32>
    %13 = arith.addf %10, %12 : vector<32x32xf32>
    %cst_11 = arith.constant 0.000000e+00 : f32
    %14 = vector.broadcast %cst_11 : f32 to vector<32x32xf32>
    %15 = arith.maximumf %13, %14 : vector<32x32xf32>
    %16 = arith.truncf %15 : vector<32x32xf32> to vector<32x32xbf16>
    %c0_12 = arith.constant 0 : index
    %c0_13 = arith.constant 0 : index
    %17 = vector.load %arg6[%c0_12, %c0_13] : memref<32x8xbf16, #tpu.memory_space<vmem>>, vector<32x8xbf16>
    %cst_14 = arith.constant dense<0.000000e+00> : vector<32x8xf32>
    %18 = tpu.matmul %16, %17, %cst_14 {dimension_numbers = #tpu.dot_dimension_numbers<[1], [0], [0], [1], [0, 0, 1, 1], [], []>} : vector<32x32xbf16>, vector<32x8xbf16>, vector<32x8xf32> -> vector<32x8xf32>
    %c0_15 = arith.constant 0 : index
    %c0_16 = arith.constant 0 : index
    %19 = vector.load %arg7[%c0_15, %c0_16] : memref<1x8xf32, #tpu.memory_space<vmem>>, vector<1x8xf32>
    %20 = vector.broadcast %19 : vector<1x8xf32> to vector<32x8xf32>
    %21 = arith.addf %18, %20 : vector<32x8xf32>
    %cst_17 = arith.constant dense<0xFF800000> : vector<32xf32>
    %22 = vector.multi_reduction <maximumf>, %21, %cst_17 [1] : vector<32x8xf32> to vector<32xf32>
    %23 = vector.shape_cast %22 : vector<32xf32> to vector<32x1xf32>
    %24 = vector.broadcast %23 : vector<32x1xf32> to vector<32x8xf32>
    %25 = arith.subf %21, %24 : vector<32x8xf32>
    %26 = math.exp %25 : vector<32x8xf32>
    %cst_18 = arith.constant dense<0.000000e+00> : vector<32xf32>
    %27 = vector.multi_reduction <add>, %26, %cst_18 [1] : vector<32x8xf32> to vector<32xf32>
    %28 = vector.shape_cast %27 : vector<32xf32> to vector<32x1xf32>
    %29 = vector.broadcast %28 : vector<32x1xf32> to vector<32x8xf32>
    %30 = arith.divf %26, %29 : vector<32x8xf32>
    %c0_19 = arith.constant 0 : index
    %c0_20 = arith.constant 0 : index
    %31 = vector.load %arg8[%c0_19, %c0_20] : memref<32x8xf32, #tpu.memory_space<vmem>>, vector<32x8xf32>
    tpu.vector_store %arg8[%c0_19, %c0_20], %30 {strides = array<i32>} : memref<32x8xf32, #tpu.memory_space<vmem>>, vector<32x8xf32>,
    return
  }
  func.func @transform_0(%arg0: i32) -> (i32, i32) {
    %c0_i32 = arith.constant 0 : i32
    %c0_i32_0 = arith.constant 0 : i32
    return %arg0, %c0_i32 : i32, i32
  }
  func.func @transform_1(%arg0: i32) -> (i32, i32) {
    %c0_i32 = arith.constant 0 : i32
    %c0_i32_0 = arith.constant 0 : i32
    %c0_i32_1 = arith.constant 0 : i32
    return %c0_i32, %c0_i32_0 : i32, i32
  }
  func.func @transform_2(%arg0: i32) -> (i32, i32) {
    %c0_i32 = arith.constant 0 : i32
    %c0_i32_0 = arith.constant 0 : i32
    %c0_i32_1 = arith.constant 0 : i32
    return %c0_i32, %c0_i32_0 : i32, i32
  }
  func.func @transform_3(%arg0: i32) -> (i32, i32) {
    %c0_i32 = arith.constant 0 : i32
    %c0_i32_0 = arith.constant 0 : i32
    %c0_i32_1 = arith.constant 0 : i32
    return %c0_i32, %c0_i32_0 : i32, i32
  }
  func.func @transform_4(%arg0: i32) -> (i32, i32) {
    %c0_i32 = arith.constant 0 : i32
    %c0_i32_0 = arith.constant 0 : i32
    %c0_i32_1 = arith.constant 0 : i32
    return %c0_i32, %c0_i32_0 : i32, i32
  }
  func.func @transform_5(%arg0: i32) -> (i32, i32) {
    %c0_i32 = arith.constant 0 : i32
    %c0_i32_0 = arith.constant 0 : i32
    %c0_i32_1 = arith.constant 0 : i32
    return %c0_i32, %c0_i32_0 : i32, i32
  }
  func.func @transform_6(%arg0: i32) -> (i32, i32) {
    %c0_i32 = arith.constant 0 : i32
    %c0_i32_0 = arith.constant 0 : i32
    %c0_i32_1 = arith.constant 0 : i32
    return %c0_i32, %c0_i32_0 : i32, i32
  }
  func.func @transform_7(%arg0: i32) -> (i32, i32) {
    %c0_i32 = arith.constant 0 : i32
    %c0_i32_0 = arith.constant 0 : i32
    return %arg0, %c0_i32 : i32, i32
  }
}

</mosaic_0001>

<llo_original>
// kernel: tpu_custom_call.1
$region0: #{tpu_custom_call.1}
  #allocation0 [shape = 'u32[]', space=smem, size = 0x4, offset = 0x4, fixed_abs, tag = 'smem constant byte address 0x4 - core index']
  #allocation1 [shape = 'u32[72,128]{1,0:T(1,128)}', space=vmem, size = 0x9000, scoped, tag = 'internal scratch']
  %s0 = inlined_call_operand.vmem [shape: bf16[64,16], index: 0, kind: input, shape index: {}]
  %s1 = inlined_call_operand.vmem [shape: bf16[16,32], index: 1, kind: input, shape index: {}]
  %s2 = inlined_call_operand.vmem [shape: f32[1,32], index: 2, kind: input, shape index: {}]
  %s3 = inlined_call_operand.vmem [shape: bf16[32,32], index: 3, kind: input, shape index: {}]
  %s4 = inlined_call_operand.vmem [shape: f32[1,32], index: 4, kind: input, shape index: {}]
  %s5 = inlined_call_operand.vmem [shape: bf16[32,8], index: 5, kind: input, shape index: {}]
  %s6 = inlined_call_operand.vmem [shape: f32[1,8], index: 6, kind: input, shape index: {}]
  %s7 = inlined_call_operand.vmem [shape: f32[64,8], index: 7, kind: output, shape index: {}]
  %s8 = sld [smem:[#allocation0]]
  $region61: #{tpu_custom_call.1} parent=0
    _
  %s10 = ssub.s32 1, %s8
  %s11 = scalar_select 0, %s10, %s8
  loop: start=0, step=1, limit=4
  $region2: #{tpu_custom_call.1} parent=0 // loop_pre_header
    _
  $region3: #{tpu_custom_call.1} parent=0 // loop_header
    %s13 = sphi 0, %s17
    %p14 = scmp.ge.s32.totalorder %s13, 4
    %s23 = sphi 0, %s25
    %s26 = sphi 0, %s23
    %s27 = sphi 0, %s26
    %s43 = sphi 0, %s27
    %s47 = sphi 0, %s47
    %s49 = sphi 0, %s47
    %s50 = sphi 0, %s49
    %s64 = sphi 0, %s50
    %s68 = sphi 0, %s68
    %s70 = sphi 0, %s68
    %s71 = sphi 0, %s70
    %s85 = sphi 0, %s71
    %s89 = sphi 0, %s89
    %s91 = sphi 0, %s89
    %s92 = sphi 0, %s91
    %s106 = sphi 0, %s92
    %s110 = sphi 0, %s110
    %s112 = sphi 0, %s110
    %s113 = sphi 0, %s112
    %s127 = sphi 0, %s113
    %s131 = sphi 0, %s131
    %s133 = sphi 0, %s131
    %s134 = sphi 0, %s133
    %s148 = sphi 0, %s134
    %s152 = sphi 0, %s152
    %s154 = sphi 0, %s152
    %s155 = sphi 0, %s154
    %s169 = sphi 0, %s155
    %s175 = sphi 0, %s177
    %s178 = sphi 0, %s175
    %s179 = sphi 0, %s178
    %s195 = sphi 0, %s179
  $region4: #{tpu_custom_call.1} parent=0 // loop_header_branch
    %16 = sbr.rel (%p14) target = $region8
  $region5: #{tpu_custom_call.1} parent=0 // loop_body
    %s18 = ssub.s32 %s13, 1
    %s19 = ssub.s32 %s13, 2
    %s20 = sadd.s32 %s13, 1
    %s21 = ssub.s32 %s13, %s20
    %p22 = scmp.eq.s32.totalorder %s21, 0
    %s24 = sadd.s32 %s23, 1
    %s25 = scalar_select %p22, %s23, %s24
    %p28 = pneg %p22
    %p29 = scmp.eq.s32.totalorder %s13, 1
    %p30 = por %p28, %p29
    %p31 = scmp.ne.s32.totalorder %s23, %s26
    %p32 = scmp.eq.s32.totalorder %s13, 0
    %p33 = por %p31, %p32
    %p34 = scmp.ne.s32.totalorder %s23, %s26
    %p35 = scmp.eq.s32.totalorder %s18, 1
    %p36 = por %p34, %p35
    %p37 = scmp.ne.s32.totalorder %s26, %s27
    %p38 = scmp.eq.s32.totalorder %s18, 0
    %p39 = por %p37, %p38
    %p40 = scmp.ne.s32.totalorder %s26, %s27
    %p41 = scmp.eq.s32.totalorder %s19, 1
    %p42 = por %p40, %p41
    %p44 = scmp.ne.s32.totalorder %s27, %s43
    %p45 = scmp.eq.s32.totalorder %s19, 0
    %p46 = por %p44, %p45
    %s48 = sadd.s32 %s47, 1
    %p51 = scmp.eq.s32.totalorder %s13, 1
    %p52 = scmp.ne.s32.totalorder %s47, %s49
    %p53 = scmp.eq.s32.totalorder %s13, 0
    %p54 = por %p52, %p53
    %p55 = scmp.ne.s32.totalorder %s47, %s49
    %p56 = scmp.eq.s32.totalorder %s18, 1
    %p57 = por %p55, %p56
    %p58 = scmp.ne.s32.totalorder %s49, %s50
    %p59 = scmp.eq.s32.totalorder %s18, 0
    %p60 = por %p58, %p59
    %p61 = scmp.ne.s32.totalorder %s49, %s50
    %p62 = scmp.eq.s32.totalorder %s19, 1
    %p63 = por %p61, %p62
    %p65 = scmp.ne.s32.totalorder %s50, %s64
    %p66 = scmp.eq.s32.totalorder %s19, 0
    %p67 = por %p65, %p66
    %s69 = sadd.s32 %s68, 1
    %p72 = scmp.eq.s32.totalorder %s13, 1
    %p73 = scmp.ne.s32.totalorder %s68, %s70
    %p74 = scmp.eq.s32.totalorder %s13, 0
    %p75 = por %p73, %p74
    %p76 = scmp.ne.s32.totalorder %s68, %s70
    %p77 = scmp.eq.s32.totalorder %s18, 1
    %p78 = por %p76, %p77
    %p79 = scmp.ne.s32.totalorder %s70, %s71
    %p80 = scmp.eq.s32.totalorder %s18, 0
    %p81 = por %p79, %p80
    %p82 = scmp.ne.s32.totalorder %s70, %s71
    %p83 = scmp.eq.s32.totalorder %s19, 1
    %p84 = por %p82, %p83
    %p86 = scmp.ne.s32.totalorder %s71, %s85
    %p87 = scmp.eq.s32.totalorder %s19, 0
    %p88 = por %p86, %p87
    %s90 = sadd.s32 %s89, 1
    %p93 = scmp.eq.s32.totalorder %s13, 1
    %p94 = scmp.ne.s32.totalorder %s89, %s91
    %p95 = scmp.eq.s32.totalorder %s13, 0
    %p96 = por %p94, %p95
    %p97 = scmp.ne.s32.totalorder %s89, %s91
    %p98 = scmp.eq.s32.totalorder %s18, 1
    %p99 = por %p97, %p98
    %p100 = scmp.ne.s32.totalorder %s91, %s92
    %p101 = scmp.eq.s32.totalorder %s18, 0
    %p102 = por %p100, %p101
    %p103 = scmp.ne.s32.totalorder %s91, %s92
    %p104 = scmp.eq.s32.totalorder %s19, 1
    %p105 = por %p103, %p104
    %p107 = scmp.ne.s32.totalorder %s92, %s106
    %p108 = scmp.eq.s32.totalorder %s19, 0
    %p109 = por %p107, %p108
    %s111 = sadd.s32 %s110, 1
    %p114 = scmp.eq.s32.totalorder %s13, 1
    %p115 = scmp.ne.s32.totalorder %s110, %s112
    %p116 = scmp.eq.s32.totalorder %s13, 0
    %p117 = por %p115, %p116
    %p118 = scmp.ne.s32.totalorder %s110, %s112
    %p119 = scmp.eq.s32.totalorder %s18, 1
    %p120 = por %p118, %p119
    %p121 = scmp.ne.s32.totalorder %s112, %s113
    %p122 = scmp.eq.s32.totalorder %s18, 0
    %p123 = por %p121, %p122
    %p124 = scmp.ne.s32.totalorder %s112, %s113
    %p125 = scmp.eq.s32.totalorder %s19, 1
    %p126 = por %p124, %p125
    %p128 = scmp.ne.s32.totalorder %s113, %s127
    %p129 = scmp.eq.s32.totalorder %s19, 0
    %p130 = por %p128, %p129
    %s132 = sadd.s32 %s131, 1
    %p135 = scmp.eq.s32.totalorder %s13, 1
    %p136 = scmp.ne.s32.totalorder %s131, %s133
    %p137 = scmp.eq.s32.totalorder %s13, 0
    %p138 = por %p136, %p137
    %p139 = scmp.ne.s32.totalorder %s131, %s133
    %p140 = scmp.eq.s32.totalorder %s18, 1
    %p141 = por %p139, %p140
    %p142 = scmp.ne.s32.totalorder %s133, %s134
    %p143 = scmp.eq.s32.totalorder %s18, 0
    %p144 = por %p142, %p143
    %p145 = scmp.ne.s32.totalorder %s133, %s134
    %p146 = scmp.eq.s32.totalorder %s19, 1
    %p147 = por %p145, %p146
    %p149 = scmp.ne.s32.totalorder %s134, %s148
    %p150 = scmp.eq.s32.totalorder %s19, 0
    %p151 = por %p149, %p150
    %s153 = sadd.s32 %s152, 1
    %p156 = scmp.eq.s32.totalorder %s13, 1
    %p157 = scmp.ne.s32.totalorder %s152, %s154
    %p158 = scmp.eq.s32.totalorder %s13, 0
    %p159 = por %p157, %p158
    %p160 = scmp.ne.s32.totalorder %s152, %s154
    %p161 = scmp.eq.s32.totalorder %s18, 1
    %p162 = por %p160, %p161
    %p163 = scmp.ne.s32.totalorder %s154, %s155
    %p164 = scmp.eq.s32.totalorder %s18, 0
    %p165 = por %p163, %p164
    %p166 = scmp.ne.s32.totalorder %s154, %s155
    %p167 = scmp.eq.s32.totalorder %s19, 1
    %p168 = por %p166, %p167
    %p170 = scmp.ne.s32.totalorder %s155, %s169
    %p171 = scmp.eq.s32.totalorder %s19, 0
    %p172 = por %p170, %p171
    %s173 = ssub.s32 %s13, %s20
    %p174 = scmp.eq.s32.totalorder %s173, 0
    %s176 = sadd.s32 %s175, 1
    %s177 = scalar_select %p174, %s175, %s176
    %p180 = pneg %p174
    %p181 = scmp.eq.s32.totalorder %s13, 1
    %p182 = por %p180, %p181
    %p183 = scmp.ne.s32.totalorder %s175, %s178
    %p184 = scmp.eq.s32.totalorder %s13, 0
    %p185 = por %p183, %p184
    %p186 = scmp.ne.s32.totalorder %s175, %s178
    %p187 = scmp.eq.s32.totalorder %s18, 1
    %p188 = por %p186, %p187
    %p189 = scmp.ne.s32.totalorder %s178, %s179
    %p190 = scmp.eq.s32.totalorder %s18, 0
    %p191 = por %p189, %p190
    %p192 = scmp.ne.s32.totalorder %s178, %s179
    %p193 = scmp.eq.s32.totalorder %s19, 1
    %p194 = por %p192, %p193
    %p196 = scmp.ne.s32.totalorder %s179, %s195
    %p197 = scmp.eq.s32.totalorder %s19, 0
    %p198 = por %p196, %p197
    %p199 = scmp.le.s32.totalorder 1, %s13
    %p200 = scmp.lt.s32.totalorder %s13, 3
    %p201 = pnand %p199, %p200
    %p202 = pneg %p201
    // Predicated region
    $region9: #{tpu_custom_call.1} parent=5 // pred_check
      _
    $region10: #{tpu_custom_call.1} parent=5 // pred_check_branch
      %204 = sbr.rel (%p201) target = $region12
    $region11: #{tpu_custom_call.1} parent=5 // pred_region
      %s205 = ssub.s32 %s13, 1
      // Predicated region
      $region13: #{tpu_custom_call.1} parent=11 // pred_check
        %p206 = pneg %p60
      $region14: #{tpu_custom_call.1} parent=11 // pred_check_branch
        %208 = sbr.rel (%p206) target = $region16
      $region15: #{tpu_custom_call.1} parent=11 // pred_region
        _
      $region16: #{tpu_custom_call.1} parent=11 // pred_fallthru
        _
      // Predicated region
      $region17: #{tpu_custom_call.1} parent=11 // pred_check
        %p209 = pneg %p81
      $region18: #{tpu_custom_call.1} parent=11 // pred_check_branch
        %211 = sbr.rel (%p209) target = $region20
      $region19: #{tpu_custom_call.1} parent=11 // pred_region
        _
      $region20: #{tpu_custom_call.1} parent=11 // pred_fallthru
        _
      // Predicated region
      $region21: #{tpu_custom_call.1} parent=11 // pred_check
        %p212 = pneg %p102
      $region22: #{tpu_custom_call.1} parent=11 // pred_check_branch
        %214 = sbr.rel (%p212) target = $region24
      $region23: #{tpu_custom_call.1} parent=11 // pred_region
        _
      $region24: #{tpu_custom_call.1} parent=11 // pred_fallthru
        _
      // Predicated region
      $region25: #{tpu_custom_call.1} parent=11 // pred_check
        %p215 = pneg %p123
      $region26: #{tpu_custom_call.1} parent=11 // pred_check_branch
        %217 = sbr.rel (%p215) target = $region28
      $region27: #{tpu_custom_call.1} parent=11 // pred_region
        _
      $region28: #{tpu_custom_call.1} parent=11 // pred_fallthru
        _
      // Predicated region
      $region29: #{tpu_custom_call.1} parent=11 // pred_check
        %p218 = pneg %p144
      $region30: #{tpu_custom_call.1} parent=11 // pred_check_branch
        %220 = sbr.rel (%p218) target = $region32
      $region31: #{tpu_custom_call.1} parent=11 // pred_region
        _
      $region32: #{tpu_custom_call.1} parent=11 // pred_fallthru
        _
      // Predicated region
      $region33: #{tpu_custom_call.1} parent=11 // pred_check
        %p221 = pneg %p165
      $region34: #{tpu_custom_call.1} parent=11 // pred_check_branch
        %223 = sbr.rel (%p221) target = $region36
      $region35: #{tpu_custom_call.1} parent=11 // pred_region
        _
      $region36: #{tpu_custom_call.1} parent=11 // pred_fallthru
        _
    $region12: #{tpu_custom_call.1} parent=5 // pred_fallthru
      _
    %p224 = scmp.lt.s32.totalorder %s13, 2
    // Predicated region
    $region37: #{tpu_custom_call.1} parent=5 // pred_check
      %p225 = pneg %p224
    $region38: #{tpu_custom_call.1} parent=5 // pred_check_branch
      %227 = sbr.rel (%p225) target = $region40
    $region39: #{tpu_custom_call.1} parent=5 // pred_region
      // Predicated region
      $region41: #{tpu_custom_call.1} parent=39 // pred_check
        %p228 = pneg %p33
      $region42: #{tpu_custom_call.1} parent=39 // pred_check_branch
        %230 = sbr.rel (%p228) target = $region44
      $region43: #{tpu_custom_call.1} parent=39 // pred_region
        %s231 = smul.u32 4, %s13
        %p232 = scmp.lt.s32.totalorder %s231, 7
        %s233 = scalar_select %p232, %s231, 7
        %s234 = smul.addr %s233, 4
        %s235 = scalar_lea.vmem %s0, %s234
        %s236 = smul.u32 4, %s13
      $region44: #{tpu_custom_call.1} parent=39 // pred_fallthru
        _
    $region40: #{tpu_custom_call.1} parent=5 // pred_fallthru
      _
    %p237 = scmp.le.s32.totalorder 1, %s13
    %p238 = scmp.lt.s32.totalorder %s13, 3
    %p239 = pnand %p237, %p238
    %p240 = pneg %p239
    // Predicated region
    $region45: #{tpu_custom_call.1} parent=5 // pred_check
      _
    $region46: #{tpu_custom_call.1} parent=5 // pred_check_branch
      %242 = sbr.rel (%p239) target = $region48
    $region47: #{tpu_custom_call.1} parent=5 // pred_region
      %s243 = ssub.s32 %s13, 1
      %s244 = smul.u32 4, %s18
      %p245 = scmp.lt.s32.totalorder %s244, 7
      %s246 = scalar_select %p245, %s244, 7
      %s247 = smul.addr %s246, 4
      %s248 = scalar_lea.vmem %s0, %s247
      %p249 = pneg %p39
      %p250 = pneg %p36
      %p251 = pneg %p60
      %p252 = pneg %p57
      %p253 = pneg %p81
      %p254 = pneg %p78
      %p255 = pneg %p102
      %p256 = pneg %p99
      %p257 = pneg %p123
      %p258 = pneg %p120
      %p259 = pneg %p144
      %p260 = pneg %p141
      %p261 = pneg %p165
      %p262 = pneg %p162
      %p263 = pneg %p191
      %p264 = pneg %p188
      %s265 = smul.u32 4, %s18
      %p266 = scmp.lt.s32.totalorder %s265, 7
      %s267 = scalar_select %p266, %s265, 7
      %s268 = smul.addr %s267, 8
      %s269 = scalar_lea.vmem %s7, %s268
      %s270 = smul.u32 4, %s18
      %p271 = scmp.lt.s32.totalorder %s270, 7
      %s272 = scalar_select %p271, %s270, 7
      %s273 = smul.addr %s272, 4
      %s274 = scalar_lea.vmem %s0, %s273
      %s275 = smul.u32 4, %s18
      %s276 = smul.u32 4, %s18
      %p277 = scmp.lt.s32.totalorder %s276, 7
      %s278 = scalar_select %p277, %s276, 7
      %s279 = smul.addr %s278, 8
      %s280 = scalar_lea.vmem %s7, %s279
      %s281 = smul.u32 4, %s18
      %v283 = vld [vmem:[%s274] sm:$0xf]
      %v284 = vld [vmem:[%s274 + $0x4] sm:$0xf]
      %v285 = vld [vmem:[%s274 + $0x8] sm:$0xf]
      %v286 = vld [vmem:[%s274 + $0xc] sm:$0xf]
      %v287 = vld [vmem:[%s1] sm:$0xf]
      %v288 = vld [vmem:[%s1 + $0x4] sm:$0xf]
      %v289 = vld [vmem:[%s2] sm:$0x1]
      %v291 = vperm.slane %v289, 0
      %v297 = vunpack.c.l.b16 %v283
      %v298 = vunpack.c.l.b16 %v284
      %v299 = vunpack.c.l.b16 %v285
      %v300 = vunpack.c.l.b16 %v286
      %v301 = vpack.c.b16 %v298, %v297
      %v302 = vpack.c.b16 %v300, %v299
      %v305 = vunpack.c.l.b16 %v287
      %v306 = vunpack.c.l.b16 %v288
      %v307 = vpack.c.b16 %v306, %v305
      %vm309 = vcmask 130048
      %v311 = vsel %vm309, %v301, 0
      %v314 = vsel %vm309, %v302, 0
      %316 = vmatpush.bf16.msra.mxu0 0
      %317 = vmatpush.bf16.msra.mxu0 0
      %318 = vmatpush.bf16.msra.mxu0 0
      %319 = vmatpush.bf16.msra.mxu0 0
      %320 = vmatpush.bf16.msra.mxu0 0
      %321 = vmatpush.bf16.msra.mxu0 0
      %322 = vmatpush.bf16.msra.mxu0 0
      %323 = vmatpush.bf16.msra.mxu0 %v307
      %324 = vmatmul.bf16.gmra.mxu0 %v311
      %v325 = vpop.f32.mrf.mxu0
      %v326 = vadd.f32 %v291, %v325
      %v327 = vpop.f32.mrf.mxu0
      %v328 = vadd.f32 %v291, %v327
      %329 = vmatmul.bf16.gmra.mxu0 %v314
      %v330 = vpop.f32.mrf.mxu0
      %v331 = vadd.f32 %v291, %v330
      %v332 = vpop.f32.mrf.mxu0
      %v333 = vadd.f32 %v291, %v332
      %334 = vdwg.mxu0
      %v335 = vmax.f32 %v326, 0.0
      %v336 = vmax.f32 %v328, 0.0
      %v337 = vmax.f32 %v331, 0.0
      %v338 = vmax.f32 %v333, 0.0
      %v339 = vpack.c.bf16 %v336, %v335
      %v340 = vpack.c.bf16 %v338, %v337
      %v341 = vld [vmem:[%s3] sm:$0xf]
      %v342 = vld [vmem:[%s3 + $0x4] sm:$0xf]
      %v343 = vld [vmem:[%s3 + $0x8] sm:$0xf]
      %v344 = vld [vmem:[%s3 + $0xc] sm:$0xf]
      %v345 = vld [vmem:[%s4] sm:$0x1]
      %v347 = vperm.slane %v345, 0
      %v353 = vunpack.c.l.b16 %v341
      %v354 = vunpack.c.l.b16 %v342
      %v355 = vunpack.c.l.b16 %v343
      %v356 = vunpack.c.l.b16 %v344
      %v357 = vpack.c.b16 %v354, %v353
      %v358 = vpack.c.b16 %v356, %v355
      %vm361 = vcmask 261120
      %v363 = vsel %vm361, %v339, 0
      %v366 = vsel %vm361, %v340, 0
      %368 = vmatpush.bf16.msra.mxu0 0
      %369 = vmatpush.bf16.msra.mxu0 0
      %370 = vmatpush.bf16.msra.mxu0 0
      %371 = vmatpush.bf16.msra.mxu0 0
      %372 = vmatpush.bf16.msra.mxu0 0
      %373 = vmatpush.bf16.msra.mxu0 0
      %374 = vmatpush.bf16.msra.mxu0 %v358
      %375 = vmatpush.bf16.msra.mxu0 %v357
      %376 = vmatmul.bf16.gmra.mxu0 %v363
      %v377 = vpop.f32.mrf.mxu0
      %v378 = vadd.f32 %v347, %v377
      %v379 = vpop.f32.mrf.mxu0
      %v380 = vadd.f32 %v347, %v379
      %381 = vmatmul.bf16.gmra.mxu0 %v366
      %v382 = vpop.f32.mrf.mxu0
      %v383 = vadd.f32 %v347, %v382
      %v384 = vpop.f32.mrf.mxu0
      %v385 = vadd.f32 %v347, %v384
      %386 = vdwg.mxu0
      %v387 = vmax.f32 %v378, 0.0
      %v388 = vmax.f32 %v380, 0.0
      %v389 = vmax.f32 %v383, 0.0
      %v390 = vmax.f32 %v385, 0.0
      %v391 = vpack.c.bf16 %v388, %v387
      %v392 = vpack.c.bf16 %v390, %v389
      %v393 = vld [vmem:[%s5] sm:$0xf]
      %v394 = vld [vmem:[%s5 + $0x4] sm:$0xf]
      %v395 = vld [vmem:[%s5 + $0x8] sm:$0xf]
      %v396 = vld [vmem:[%s5 + $0xc] sm:$0xf]
      %v397 = vld [vmem:[%s6] sm:$0x1]
      %v399 = vperm.slane %v397, 0
      %v405 = vunpack.c.l.b16 %v393
      %v406 = vunpack.c.l.b16 %v394
      %v407 = vunpack.c.l.b16 %v395
      %v408 = vunpack.c.l.b16 %v396
      %v409 = vpack.c.b16 %v406, %v405
      %v410 = vpack.c.b16 %v408, %v407
      %v414 = vsel %vm361, %v391, 0
      %v417 = vsel %vm361, %v392, 0
      %419 = vmatpush.bf16.msra.mxu0 0
      %420 = vmatpush.bf16.msra.mxu0 0
      %421 = vmatpush.bf16.msra.mxu0 0
      %422 = vmatpush.bf16.msra.mxu0 0
      %423 = vmatpush.bf16.msra.mxu0 0
      %424 = vmatpush.bf16.msra.mxu0 0
      %425 = vmatpush.bf16.msra.mxu0 %v410
      %426 = vmatpush.bf16.msra.mxu0 %v409
      %427 = vmatmul.bf16.gmra.mxu0 %v414
      %v428 = vpop.f32.mrf.mxu0
      %v429 = vadd.f32 %v399, %v428
      %v430 = vpop.f32.mrf.mxu0
      %v431 = vadd.f32 %v399, %v430
      %432 = vmatmul.bf16.gmra.mxu0 %v417
      %v433 = vpop.f32.mrf.mxu0
      %v434 = vadd.f32 %v399, %v433
      %v435 = vpop.f32.mrf.mxu0
      %v436 = vadd.f32 %v399, %v435
      %437 = vdwg.mxu0
      %vm438 = vcmask 64512
      %v439 = vsel %vm438, %v429, -inf
      %440 = vmax.xlane.f32.xlu0 %v439
      %v441 = vpop.xlane.xlu0 %440
      %v442 = vsel %vm438, %v431, -inf
      %443 = vmax.xlane.f32.xlu0 %v442
      %v444 = vpop.xlane.xlu0 %443
      %v445 = vsel %vm438, %v434, -inf
      %446 = vmax.xlane.f32.xlu0 %v445
      %v447 = vpop.xlane.xlu0 %446
      %v448 = vsel %vm438, %v436, -inf
      %449 = vmax.xlane.f32.xlu0 %v448
      %v450 = vpop.xlane.xlu0 %449
      %v451 = vsub.f32 %v429, %v441
      %v452 = vsub.f32 %v431, %v444
      %v453 = vsub.f32 %v434, %v447
      %v454 = vsub.f32 %v436, %v450
      %v455 = vmul.f32 %v451, 1.442695
      %v456 = vpow.pop %v455
      %v457 = vmul.f32 %v452, 1.442695
      %v458 = vpow.pop %v457
      %v459 = vmul.f32 %v453, 1.442695
      %v460 = vpow.pop %v459
      %v461 = vmul.f32 %v454, 1.442695
      %v462 = vpow.pop %v461
      %v463 = vsel %vm438, %v456, 0.0
      %464 = vadd.xlane.f32.xlu0 %v463
      %v465 = vpop.xlane.xlu0 %464
      %v466 = vsel %vm438, %v458, 0.0
      %467 = vadd.xlane.f32.xlu0 %v466
      %v468 = vpop.xlane.xlu0 %467
      %v469 = vsel %vm438, %v460, 0.0
      %470 = vadd.xlane.f32.xlu0 %v469
      %v471 = vpop.xlane.xlu0 %470
      %v472 = vsel %vm438, %v462, 0.0
      %473 = vadd.xlane.f32.xlu0 %v472
      %v474 = vpop.xlane.xlu0 %473
      %v475 = vrcp.pop %v465
      %v476 = vmul.f32 %v465, %v475
      %v477 = vsub.f32 1.0, %v476
      %v478 = vmul.f32 %v475, %v477
      %v479 = vadd.f32 %v475, %v478
      %vm480 = vweird.f32 %v465
      %vm481 = vweird.f32 %v475
      %vm482 = vmor %vm480, %vm481
      %v483 = vsel %vm482, %v475, %v479
      %v484 = vand.u32 2147483647, %v465
      %vm485 = vcmp.eq.f32.partialorder %v484, 8.507059e+37
      %v486 = vand.u32 %v465, 2147483648
      %v487 = vor.u32 1.1754944e-38, %v486
      %v488 = vsel %vm485, %v487, %v483
      %v489 = vmul.f32 %v456, %v488
      %v490 = vrcp.pop %v468
      %v491 = vmul.f32 %v468, %v490
      %v492 = vsub.f32 1.0, %v491
      %v493 = vmul.f32 %v490, %v492
      %v494 = vadd.f32 %v490, %v493
      %vm495 = vweird.f32 %v468
      %vm496 = vweird.f32 %v490
      %vm497 = vmor %vm495, %vm496
      %v498 = vsel %vm497, %v490, %v494
      %v499 = vand.u32 2147483647, %v468
      %vm500 = vcmp.eq.f32.partialorder %v499, 8.507059e+37
      %v501 = vand.u32 %v468, 2147483648
      %v502 = vor.u32 1.1754944e-38, %v501
      %v503 = vsel %vm500, %v502, %v498
      %v504 = vmul.f32 %v458, %v503
      %v505 = vrcp.pop %v471
      %v506 = vmul.f32 %v471, %v505
      %v507 = vsub.f32 1.0, %v506
      %v508 = vmul.f32 %v505, %v507
      %v509 = vadd.f32 %v505, %v508
      %vm510 = vweird.f32 %v471
      %vm511 = vweird.f32 %v505
      %vm512 = vmor %vm510, %vm511
      %v513 = vsel %vm512, %v505, %v509
      %v514 = vand.u32 2147483647, %v471
      %vm515 = vcmp.eq.f32.partialorder %v514, 8.507059e+37
      %v516 = vand.u32 %v471, 2147483648
      %v517 = vor.u32 1.1754944e-38, %v516
      %v518 = vsel %vm515, %v517, %v513
      %v519 = vmul.f32 %v460, %v518
      %v520 = vrcp.pop %v474
      %v521 = vmul.f32 %v474, %v520
      %v522 = vsub.f32 1.0, %v521
      %v523 = vmul.f32 %v520, %v522
      %v524 = vadd.f32 %v520, %v523
      %vm525 = vweird.f32 %v474
      %vm526 = vweird.f32 %v520
      %vm527 = vmor %vm525, %vm526
      %v528 = vsel %vm527, %v520, %v524
      %v529 = vand.u32 2147483647, %v474
      %vm530 = vcmp.eq.f32.partialorder %v529, 8.507059e+37
      %v531 = vand.u32 %v474, 2147483648
      %v532 = vor.u32 1.1754944e-38, %v531
      %v533 = vsel %vm530, %v532, %v528
      %v534 = vmul.f32 %v462, %v533
      %535 = vst.msk [vmem:[%s280] sm:$0xff] %vm438, %v489
      %536 = vst.msk [vmem:[%s280 + $0x8] sm:$0xff] %vm438, %v504
      %537 = vst.msk [vmem:[%s280 + $0x10] sm:$0xff] %vm438, %v519
      %538 = vst.msk [vmem:[%s280 + $0x18] sm:$0xff] %vm438, %v534
      %s539 = smul.u32 4, %s18
      %p540 = scmp.lt.s32.totalorder %s539, 7
      %s541 = scalar_select %p540, %s539, 7
      %s542 = smul.addr %s541, 8
      %s543 = scalar_lea.vmem %s7, %s542
      // Predicated region
      $region49: #{tpu_custom_call.1} parent=47 // pred_check
        %p544 = pneg %p188
      $region50: #{tpu_custom_call.1} parent=47 // pred_check_branch
        %546 = sbr.rel (%p544) target = $region52
      $region51: #{tpu_custom_call.1} parent=47 // pred_region
        %s547 = smul.u32 4, %s18
      $region52: #{tpu_custom_call.1} parent=47 // pred_fallthru
        _
    $region48: #{tpu_custom_call.1} parent=5 // pred_fallthru
      _
    %p548 = scmp.le.s32.totalorder 2, %s13
    // Predicated region
    $region53: #{tpu_custom_call.1} parent=5 // pred_check
      %p549 = pneg %p548
    $region54: #{tpu_custom_call.1} parent=5 // pred_check_branch
      %551 = sbr.rel (%p549) target = $region56
    $region55: #{tpu_custom_call.1} parent=5 // pred_region
      %s552 = ssub.s32 %s13, 2
      // Predicated region
      $region57: #{tpu_custom_call.1} parent=55 // pred_check
        %p553 = pneg %p194
      $region58: #{tpu_custom_call.1} parent=55 // pred_check_branch
        %555 = sbr.rel (%p553) target = $region60
      $region59: #{tpu_custom_call.1} parent=55 // pred_region
        %s556 = smul.u32 4, %s19
        %p557 = scmp.lt.s32.totalorder %s556, 7
        %s558 = scalar_select %p557, %s556, 7
        %s559 = smul.addr %s558, 8
        %s560 = scalar_lea.vmem %s7, %s559
      $region60: #{tpu_custom_call.1} parent=55 // pred_fallthru
        _
    $region56: #{tpu_custom_call.1} parent=5 // pred_fallthru
      _
  $region6: #{tpu_custom_call.1} parent=0 // loop_footer
    %s17 = sadd.s32 1, %s13
  $region7: #{tpu_custom_call.1} parent=0 // loop_footer_branch
    %12 = sbr.rel target = $region3
  $region8: #{tpu_custom_call.1} parent=0 // loop_exit
    _

</llo_original>
